<compile_context>
chip_gen: v7x
topology: tpu7x:2x2x1
jax: 0.10.0
libtpu: 0.0.40
codegen_flags: <defaults>
</compile_context>

<pallas_src>
import math

import jax
import jax.numpy as jnp
from jax import lax
from jax.experimental import pallas as pl
from jax.experimental.pallas import tpu as pltpu

OBS_DIM = 16
ACT_DIM = 4
HIDDEN = 32
BATCH = 8

LANES = 128                      # lane width of the input/output slabs
IN_LANES = 32                    # lanes of the input slab that actually carry payload
H2 = 2 * HIDDEN                  # fused hidden frame (policy lanes 0:H, value lanes H:2H)

# ----- input-slab lane layout ([B, 128], payload in lanes 0..27) -----
NOISE_OFF = 0                    # noise at lanes [0, ACT)     (aligned with mu / pi)
X_OFF = 8                        # x     at lanes [8, 8+OBS)
A_OFF = 24                       # a     at lanes [24, 24+ACT) (aligned with the mu copy)

# ----- output-slab lane layout ([B, 128]) -----
LOGP_LANE = ACT_DIM              # 4
LOGPPI_LANE = ACT_DIM + 1        # 5
V_LANE = ACT_DIM + 2             # 6

# ----- bf16 weight-slab row layout ([160, 128]) -----
W1_ROW = 0                       # 32 rows, indexed by input lanes 0..31
W2_ROW = 32                      # 64 rows, block-diagonal over the hidden frame
W3_ROW = 96                      # 64 rows, -> mu (+copy) and v
W_ROWS = 160

# ----- f32 tail row layout ([8, 128]) -----
B1_ROW, B2_ROW, B3_ROW = 0, 1, 2
LOGSTD_ROW, CONST_ROW = 3, 4
TAIL_ROWS = 8

LOG2PI = math.log(2.0 * math.pi)


def _ac_wm_kernel(xan_ref, w_ref, tail_ref, out_ref):
    xan = xan_ref[...]                                   # [TB, 128] f32
    tail = tail_ref[...]                                 # [8, 128]  f32 (one aligned load)

    b1 = tail[B1_ROW:B1_ROW + 1, :]                      # [1, 128]
    b2 = tail[B2_ROW:B2_ROW + 1, :]
    b3 = tail[B3_ROW:B3_ROW + 1, :]
    log_std_row = tail[LOGSTD_ROW:LOGSTD_ROW + 1, :]     # log_std at pi lanes and a lanes
    const_row = tail[CONST_ROW:CONST_ROW + 1, :]         # 2*log_std + log(2*pi) there, 0 else

    w1 = w_ref[W1_ROW:W1_ROW + IN_LANES, :]              # [32, 128] bf16
    w2 = w_ref[W2_ROW:W2_ROW + H2, :]                    # [64, 128] bf16
    w3 = w_ref[W3_ROW:W3_ROW + H2, :]                    # [64, 128] bf16

    # --- fused policy + value MLP (bf16 MXU passes, f32 accumulation) ---
    x_in = xan[:, :IN_LANES].astype(jnp.bfloat16)        # relayout-free lane prefix
    h = jnp.maximum(
        jnp.dot(x_in, w1, preferred_element_type=jnp.float32) + b1, 0.0)
    h = jnp.maximum(
        jnp.dot(h[:, :H2].astype(jnp.bfloat16), w2,
                preferred_element_type=jnp.float32) + b2, 0.0)
    o3 = jnp.dot(h[:, :H2].astype(jnp.bfloat16), w3,
                 preferred_element_type=jnp.float32) + b3
    # o3: mu at lanes [0,ACT), v at V_LANE, mu copy at [A_OFF, A_OFF+ACT), 0 elsewhere

    tb = xan.shape[0]
    lane = lax.broadcasted_iota(jnp.int32, (tb, LANES), 1)
    pi_mask = lane < ACT_DIM                              # lanes holding noise / mu / pi
    a_mask = (lane >= A_OFF) & (lane < A_OFF + ACT_DIM)   # lanes holding a / mu copy

    std_row = jnp.exp(log_std_row)                        # std at pi lanes (1 elsewhere)
    inv_std_row = jnp.exp(-log_std_row)                   # 1/std at a lanes (1 elsewhere)

    # Fused epilogue register (pi and a lane masks are disjoint):
    #   r = noise at pi lanes, (a - mu)/std at a lanes, 0 elsewhere.
    r = jnp.where(pi_mask, xan, jnp.where(a_mask, (xan - o3) * inv_std_row, 0.0))
    term = -0.5 * (r * r + const_row)                     # const_row is 0 off pi/a lanes
    logp_pi = jnp.sum(jnp.where(pi_mask, term, 0.0), axis=-1, keepdims=True)   # [TB, 1]
    logp = jnp.sum(jnp.where(a_mask, term, 0.0), axis=-1, keepdims=True)       # [TB, 1]

    # Assemble one lane-dense [TB, 128] output: pi | logp | logp_pi | v | zeros.
    out = jnp.where(pi_mask | (lane == V_LANE), o3, 0.0)  # keep mu (-> pi) and v
    out = out + jnp.where(pi_mask, std_row * r, 0.0)      # pi = mu + std * noise
    out = out + jnp.where(lane == LOGP_LANE, logp,
                          jnp.where(lane == LOGPPI_LANE, logp_pi, 0.0))
    out_ref[...] = out


def _round_up(n, m):
    return ((n + m - 1) // m) * m


def init_params(key):
    ks = jax.random.split(key, 12)
    scale = 0.1

    def w(k, shape):
        return scale * jax.random.normal(k, shape, dtype=jnp.float32)

    return (
        # policy
        w(ks[0], (OBS_DIM, HIDDEN)),                 # pw1
        jnp.zeros((1, HIDDEN), jnp.float32),         # pb1
        w(ks[1], (HIDDEN, HIDDEN)),                  # pw2
        jnp.zeros((1, HIDDEN), jnp.float32),         # pb2
        w(ks[2], (HIDDEN, ACT_DIM)),                 # pwmu
        jnp.zeros((1, ACT_DIM), jnp.float32),        # pbmu
        -0.5 * jnp.ones((1, ACT_DIM), jnp.float32),  # log_std
        # value / world model (split weight for concat([x, a]))
        w(ks[3], (OBS_DIM, HIDDEN)),                 # vwx
        w(ks[4], (ACT_DIM, HIDDEN)),                 # vwa
        jnp.zeros((1, HIDDEN), jnp.float32),         # vb1
        w(ks[5], (HIDDEN, HIDDEN)),                  # vw2
        jnp.zeros((1, HIDDEN), jnp.float32),         # vb2
        w(ks[6], (HIDDEN, 1)),                       # vw3
        jnp.zeros((1, 1), jnp.float32),              # vb3
    )


def pack_params(params):
    """Pack the 14 parameter tensors into (bf16 weight slab [160,128], f32 tail [8,128])."""
    (pw1, pb1, pw2, pb2, pwmu, pbmu, log_std,
     vwx, vwa, vb1, vw2, vb2, vw3, vb3) = params
    H = HIDDEN

    w = jnp.zeros((W_ROWS, LANES), jnp.float32)
    # layer 1: rows indexed by the input-slab payload lanes, cols = fused hidden frame
    w = w.at[W1_ROW + X_OFF:W1_ROW + X_OFF + OBS_DIM, 0:H].set(pw1)
    w = w.at[W1_ROW + X_OFF:W1_ROW + X_OFF + OBS_DIM, H:2 * H].set(vwx)
    w = w.at[W1_ROW + A_OFF:W1_ROW + A_OFF + ACT_DIM, H:2 * H].set(vwa)
    # layer 2: block diagonal over the 64-lane hidden frame
    w = w.at[W2_ROW:W2_ROW + H, 0:H].set(pw2)
    w = w.at[W2_ROW + H:W2_ROW + 2 * H, H:2 * H].set(vw2)
    # layer 3: mu at lanes [0,ACT), a copy at [A_OFF, A_OFF+ACT); v at V_LANE
    w = w.at[W3_ROW:W3_ROW + H, 0:ACT_DIM].set(pwmu)
    w = w.at[W3_ROW:W3_ROW + H, A_OFF:A_OFF + ACT_DIM].set(pwmu)
    w = w.at[W3_ROW + H:W3_ROW + 2 * H, V_LANE:V_LANE + 1].set(vw3)
    wslab = w.astype(jnp.bfloat16)                   # MXU truncates to bf16 anyway

    tail = jnp.zeros((TAIL_ROWS, LANES), jnp.float32)
    tail = tail.at[B1_ROW, 0:H].set(pb1[0])
    tail = tail.at[B1_ROW, H:2 * H].set(vb1[0])
    tail = tail.at[B2_ROW, 0:H].set(pb2[0])
    tail = tail.at[B2_ROW, H:2 * H].set(vb2[0])
    tail = tail.at[B3_ROW, 0:ACT_DIM].set(pbmu[0])
    tail = tail.at[B3_ROW, A_OFF:A_OFF + ACT_DIM].set(pbmu[0])
    tail = tail.at[B3_ROW, V_LANE].set(vb3[0, 0])
    tail = tail.at[LOGSTD_ROW, 0:ACT_DIM].set(log_std[0])
    tail = tail.at[LOGSTD_ROW, A_OFF:A_OFF + ACT_DIM].set(log_std[0])
    const = 2.0 * log_std[0] + LOG2PI
    tail = tail.at[CONST_ROW, 0:ACT_DIM].set(const)
    tail = tail.at[CONST_ROW, A_OFF:A_OFF + ACT_DIM].set(const)
    return wslab, tail


def pack_inputs(x, a, noise, b_pad):
    """Pack x / a / noise into one lane-dense [b_pad, 128] slab (single DMA)."""
    b = x.shape[0]
    xan = jnp.zeros((b_pad, LANES), jnp.float32)
    xan = xan.at[:b, NOISE_OFF:NOISE_OFF + ACT_DIM].set(noise)
    xan = xan.at[:b, X_OFF:X_OFF + OBS_DIM].set(x)
    xan = xan.at[:b, A_OFF:A_OFF + ACT_DIM].set(a)
    return xan


def _choose_tile(b):
    """Large batch tiles (amortize ~0.35us/step); >=2 steps above 512 rows for v7x's 2 TCs."""
    b8 = _round_up(max(b, 1), 8)
    if b8 <= 512:
        tb = b8
    else:
        tb = min(512, _round_up((b8 + 1) // 2, 8))
    b_pad = _round_up(b8, tb)
    return tb, b_pad


def actor_critic_wm(x, a, noise, packed_params):
    wslab, tail = packed_params
    b = x.shape[0]
    tb, b_pad = _choose_tile(b)
    xan = pack_inputs(x, a, noise, b_pad)

    # Advisory cost hint: 3 fused matmuls per row, slab + activation traffic.
    flops = 2 * b_pad * (IN_LANES + H2 + H2) * LANES
    bytes_accessed = (b_pad * LANES * 4 * 2            # input slab + output slab (f32)
                      + W_ROWS * LANES * 2             # bf16 weight slab
                      + TAIL_ROWS * LANES * 4)         # f32 tail
    cost = pl.CostEstimate(flops=flops,
                           transcendentals=2 * LANES * (b_pad // tb),
                           bytes_accessed=bytes_accessed)

    out = pl.pallas_call(
        _ac_wm_kernel,
        out_shape=jax.ShapeDtypeStruct((b_pad, LANES), jnp.float32),
        grid_spec=pltpu.PrefetchScalarGridSpec(
            num_scalar_prefetch=0,
            grid=(b_pad // tb,),
            in_specs=[
                pl.BlockSpec((tb, LANES), lambda i: (i, 0)),        # activations (tiled over B)
                pl.BlockSpec((W_ROWS, LANES), lambda i: (0, 0)),    # bf16 weights, VMEM resident
                pl.BlockSpec((TAIL_ROWS, LANES), lambda i: (0, 0)),  # f32 tail, VMEM resident
            ],
            out_specs=pl.BlockSpec((tb, LANES), lambda i: (i, 0)),
        ),
        compiler_params=pltpu.CompilerParams(
            dimension_semantics=("parallel",),
        ),
        cost_estimate=cost,
    )(xan, wslab, tail)

    pi = out[:b, 0:ACT_DIM]
    logp = out[:b, LOGP_LANE]
    logp_pi = out[:b, LOGPPI_LANE]
    v = out[:b, V_LANE]
    return pi, logp, logp_pi, v


def _reference(x, a, noise, params):
    (pw1, pb1, pw2, pb2, pwmu, pbmu, log_std,
     vwx, vwa, vb1, vw2, vb2, vw3, vb3) = params
    h = jnp.maximum(x @ pw1 + pb1, 0.0)
    h = jnp.maximum(h @ pw2 + pb2, 0.0)
    mu = h @ pwmu + pbmu
    std = jnp.exp(log_std)
    pi = mu + noise * std

    def ll(val):
        z = (val - mu) / std
        return jnp.sum(-0.5 * (z * z + 2.0 * log_std + jnp.log(2.0 * jnp.pi)), axis=-1)

    hv = jnp.maximum(x @ vwx + a @ vwa + vb1, 0.0)
    hv = jnp.maximum(hv @ vw2 + vb2, 0.0)
    v = (hv @ vw3 + vb3)[:, 0]
    return pi, ll(a), ll(pi), v


if __name__ == "__main__":
    key = jax.random.PRNGKey(0)
    kx, ka, kn, kp = jax.random.split(key, 4)

    x = jax.random.normal(kx, (BATCH, OBS_DIM), dtype=jnp.float32)
    a = jax.random.normal(ka, (BATCH, ACT_DIM), dtype=jnp.float32)
    noise = jax.random.normal(kn, (BATCH, ACT_DIM), dtype=jnp.float32)
    params = init_params(kp)
    packed = pack_params(params)

    pi, logp, logp_pi, v = jax.block_until_ready(actor_critic_wm(x, a, noise, packed))

    # Sanity check against a pure-JAX f32 reference (uses the raw, unpacked params).
    # Tolerances allow for the bf16 weight slab; in practice the XLA reference matmuls
    # also run as bf16 MXU passes at default TPU precision, so the real diff is tiny.
    rpi, rlogp, rlogp_pi, rv = _reference(x, a, noise, params)
    assert pi.shape == (BATCH, ACT_DIM) and logp.shape == (BATCH,)
    assert logp_pi.shape == (BATCH,) and v.shape == (BATCH,)
    assert jnp.allclose(pi, rpi, atol=5e-3), jnp.max(jnp.abs(pi - rpi))
    assert jnp.allclose(v, rv, atol=5e-3), jnp.max(jnp.abs(v - rv))
    assert jnp.allclose(logp, rlogp, atol=3e-2), jnp.max(jnp.abs(logp - rlogp))
    assert jnp.allclose(logp_pi, rlogp_pi, atol=3e-2), jnp.max(jnp.abs(logp_pi - rlogp_pi))

    print("KERNEL_OK")
</pallas_src>

<mosaic_0001>
module attributes {stable_mosaic.version = 11 : i64} {
  func.func @_ac_wm_kernel(%arg0: i32, %arg1: memref<8x128xf32, #tpu.memory_space<vmem>>, %arg2: memref<160x128xbf16, #tpu.memory_space<vmem>>, %arg3: memref<8x128xf32, #tpu.memory_space<vmem>>, %arg4: memref<8x128xf32, #tpu.memory_space<vmem>>) attributes {dimension_semantics = [#tpu.dimension_semantics<parallel>], iteration_bounds = array<i64: 1>, scalar_prefetch = 0 : i64, scratch_operands = 0 : i64, tpu.core_type = #tpu.core_type<tc>, window_params = [{transform_indices = @transform_0, window_bounds = array<i64: 8, 128>}, {pipeline_mode = #tpu.pipeline_mode<synchronous>, transform_indices = @transform_1, window_bounds = array<i64: 160, 128>}, {pipeline_mode = #tpu.pipeline_mode<synchronous>, transform_indices = @transform_2, window_bounds = array<i64: 8, 128>}, {transform_indices = @transform_3, window_bounds = array<i64: 8, 128>}]} {
    %c0 = arith.constant 0 : index
    %c0_0 = arith.constant 0 : index
    %0 = vector.load %arg1[%c0, %c0_0] : memref<8x128xf32, #tpu.memory_space<vmem>>, vector<8x128xf32>
    %c0_1 = arith.constant 0 : index
    %c0_2 = arith.constant 0 : index
    %1 = vector.load %arg3[%c0_1, %c0_2] : memref<8x128xf32, #tpu.memory_space<vmem>>, vector<8x128xf32>
    %2 = vector.extract_strided_slice %1 {offsets = [0, 0], sizes = [1, 128], strides = [1, 1]} : vector<8x128xf32> to vector<1x128xf32>
    %3 = vector.extract_strided_slice %1 {offsets = [1, 0], sizes = [1, 128], strides = [1, 1]} : vector<8x128xf32> to vector<1x128xf32>
    %4 = vector.extract_strided_slice %1 {offsets = [2, 0], sizes = [1, 128], strides = [1, 1]} : vector<8x128xf32> to vector<1x128xf32>
    %5 = vector.extract_strided_slice %1 {offsets = [3, 0], sizes = [1, 128], strides = [1, 1]} : vector<8x128xf32> to vector<1x128xf32>
    %6 = vector.extract_strided_slice %1 {offsets = [4, 0], sizes = [1, 128], strides = [1, 1]} : vector<8x128xf32> to vector<1x128xf32>
    %c0_3 = arith.constant 0 : index
    %c0_4 = arith.constant 0 : index
    %7 = vector.load %arg2[%c0_3, %c0_4] : memref<160x128xbf16, #tpu.memory_space<vmem>>, vector<32x128xbf16>
    %c32 = arith.constant 32 : index
    %c0_5 = arith.constant 0 : index
    %8 = vector.load %arg2[%c32, %c0_5] : memref<160x128xbf16, #tpu.memory_space<vmem>>, vector<64x128xbf16>
    %c96 = arith.constant 96 : index
    %c0_6 = arith.constant 0 : index
    %9 = vector.load %arg2[%c96, %c0_6] : memref<160x128xbf16, #tpu.memory_space<vmem>>, vector<64x128xbf16>
    %10 = vector.extract_strided_slice %0 {offsets = [0, 0], sizes = [8, 32], strides = [1, 1]} : vector<8x128xf32> to vector<8x32xf32>
    %11 = arith.truncf %10 : vector<8x32xf32> to vector<8x32xbf16>
    %cst = arith.constant dense<0.000000e+00> : vector<8x128xf32>
    %12 = tpu.matmul %11, %7, %cst {dimension_numbers = #tpu.dot_dimension_numbers<[1], [0], [0], [1], [0, 0, 1, 1], [], []>} : vector<8x32xbf16>, vector<32x128xbf16>, vector<8x128xf32> -> vector<8x128xf32>
    %13 = vector.broadcast %2 : vector<1x128xf32> to vector<8x128xf32>
    %14 = arith.addf %12, %13 : vector<8x128xf32>
    %cst_7 = arith.constant 0.000000e+00 : f32
    %15 = vector.broadcast %cst_7 : f32 to vector<8x128xf32>
    %16 = arith.maximumf %14, %15 : vector<8x128xf32>
    %17 = vector.extract_strided_slice %16 {offsets = [0, 0], sizes = [8, 64], strides = [1, 1]} : vector<8x128xf32> to vector<8x64xf32>
    %18 = arith.truncf %17 : vector<8x64xf32> to vector<8x64xbf16>
    %cst_8 = arith.constant dense<0.000000e+00> : vector<8x128xf32>
    %19 = tpu.matmul %18, %8, %cst_8 {dimension_numbers = #tpu.dot_dimension_numbers<[1], [0], [0], [1], [0, 0, 1, 1], [], []>} : vector<8x64xbf16>, vector<64x128xbf16>, vector<8x128xf32> -> vector<8x128xf32>
    %20 = vector.broadcast %3 : vector<1x128xf32> to vector<8x128xf32>
    %21 = arith.addf %19, %20 : vector<8x128xf32>
    %cst_9 = arith.constant 0.000000e+00 : f32
    %22 = vector.broadcast %cst_9 : f32 to vector<8x128xf32>
    %23 = arith.maximumf %21, %22 : vector<8x128xf32>
    %24 = vector.extract_strided_slice %23 {offsets = [0, 0], sizes = [8, 64], strides = [1, 1]} : vector<8x128xf32> to vector<8x64xf32>
    %25 = arith.truncf %24 : vector<8x64xf32> to vector<8x64xbf16>
    %cst_10 = arith.constant dense<0.000000e+00> : vector<8x128xf32>
    %26 = tpu.matmul %25, %9, %cst_10 {dimension_numbers = #tpu.dot_dimension_numbers<[1], [0], [0], [1], [0, 0, 1, 1], [], []>} : vector<8x64xbf16>, vector<64x128xbf16>, vector<8x128xf32> -> vector<8x128xf32>
    %27 = vector.broadcast %4 : vector<1x128xf32> to vector<8x128xf32>
    %28 = arith.addf %26, %27 : vector<8x128xf32>
    %29 = tpu.iota {dimensions = array<i32: 1>} : vector<8x128xi32>
    %c4_i32 = arith.constant 4 : i32
    %30 = vector.broadcast %c4_i32 : i32 to vector<8x128xi32>
    %31 = arith.cmpi slt, %29, %30 : vector<8x128xi32>
    %c24_i32 = arith.constant 24 : i32
    %32 = vector.broadcast %c24_i32 : i32 to vector<8x128xi32>
    %33 = arith.cmpi sge, %29, %32 : vector<8x128xi32>
    %c28_i32 = arith.constant 28 : i32
    %34 = vector.broadcast %c28_i32 : i32 to vector<8x128xi32>
    %35 = arith.cmpi slt, %29, %34 : vector<8x128xi32>
    %36 = arith.andi %33, %35 : vector<8x128xi1>
    %37 = math.exp %5 : vector<1x128xf32>
    %cst_11 = arith.constant 0.000000e+00 : f32
    %38 = vector.broadcast %cst_11 : f32 to vector<1x128xf32>
    %39 = arith.subf %38, %5 : vector<1x128xf32>
    %40 = math.exp %39 : vector<1x128xf32>
    %41 = arith.subf %0, %28 : vector<8x128xf32>
    %42 = vector.broadcast %40 : vector<1x128xf32> to vector<8x128xf32>
    %43 = arith.mulf %41, %42 : vector<8x128xf32>
    %cst_12 = arith.constant 0.000000e+00 : f32
    %44 = vector.broadcast %cst_12 : f32 to vector<8x128xf32>
    %45 = arith.select %36, %43, %44 : vector<8x128xi1>, vector<8x128xf32>
    %46 = arith.select %31, %0, %45 : vector<8x128xi1>, vector<8x128xf32>
    %47 = arith.mulf %46, %46 : vector<8x128xf32>
    %48 = vector.broadcast %6 : vector<1x128xf32> to vector<8x128xf32>
    %49 = arith.addf %47, %48 : vector<8x128xf32>
    %cst_13 = arith.constant -5.000000e-01 : f32
    %50 = vector.broadcast %cst_13 : f32 to vector<8x128xf32>
    %51 = arith.mulf %50, %49 : vector<8x128xf32>
    %cst_14 = arith.constant 0.000000e+00 : f32
    %52 = vector.broadcast %cst_14 : f32 to vector<8x128xf32>
    %53 = arith.select %31, %51, %52 : vector<8x128xi1>, vector<8x128xf32>
    %cst_15 = arith.constant dense<0.000000e+00> : vector<8xf32>
    %54 = vector.multi_reduction <add>, %53, %cst_15 [1] : vector<8x128xf32> to vector<8xf32>
    %55 = vector.shape_cast %54 : vector<8xf32> to vector<8x1xf32>
    %cst_16 = arith.constant 0.000000e+00 : f32
    %56 = vector.broadcast %cst_16 : f32 to vector<8x128xf32>
    %57 = arith.select %36, %51, %56 : vector<8x128xi1>, vector<8x128xf32>
    %cst_17 = arith.constant dense<0.000000e+00> : vector<8xf32>
    %58 = vector.multi_reduction <add>, %57, %cst_17 [1] : vector<8x128xf32> to vector<8xf32>
    %59 = vector.shape_cast %58 : vector<8xf32> to vector<8x1xf32>
    %c6_i32 = arith.constant 6 : i32
    %60 = vector.broadcast %c6_i32 : i32 to vector<8x128xi32>
    %61 = arith.cmpi eq, %29, %60 : vector<8x128xi32>
    %62 = arith.ori %31, %61 : vector<8x128xi1>
    %cst_18 = arith.constant 0.000000e+00 : f32
    %63 = vector.broadcast %cst_18 : f32 to vector<8x128xf32>
    %64 = arith.select %62, %28, %63 : vector<8x128xi1>, vector<8x128xf32>
    %65 = vector.broadcast %37 : vector<1x128xf32> to vector<8x128xf32>
    %66 = arith.mulf %65, %46 : vector<8x128xf32>
    %cst_19 = arith.constant 0.000000e+00 : f32
    %67 = vector.broadcast %cst_19 : f32 to vector<8x128xf32>
    %68 = arith.select %31, %66, %67 : vector<8x128xi1>, vector<8x128xf32>
    %69 = arith.addf %64, %68 : vector<8x128xf32>
    %c4_i32_20 = arith.constant 4 : i32
    %70 = vector.broadcast %c4_i32_20 : i32 to vector<8x128xi32>
    %71 = arith.cmpi eq, %29, %70 : vector<8x128xi32>
    %c5_i32 = arith.constant 5 : i32
    %72 = vector.broadcast %c5_i32 : i32 to vector<8x128xi32>
    %73 = arith.cmpi eq, %29, %72 : vector<8x128xi32>
    %cst_21 = arith.constant 0.000000e+00 : f32
    %74 = vector.shape_cast %55 : vector<8x1xf32> to vector<8x1xf32>
    %75 = vector.broadcast %74 : vector<8x1xf32> to vector<8x128xf32>
    %76 = vector.broadcast %cst_21 : f32 to vector<8x128xf32>
    %77 = arith.select %73, %75, %76 : vector<8x128xi1>, vector<8x128xf32>
    %78 = vector.shape_cast %59 : vector<8x1xf32> to vector<8x1xf32>
    %79 = vector.broadcast %78 : vector<8x1xf32> to vector<8x128xf32>
    %80 = arith.select %71, %79, %77 : vector<8x128xi1>, vector<8x128xf32>
    %81 = arith.addf %69, %80 : vector<8x128xf32>
    %c0_22 = arith.constant 0 : index
    %c0_23 = arith.constant 0 : index
    %82 = vector.load %arg4[%c0_22, %c0_23] : memref<8x128xf32, #tpu.memory_space<vmem>>, vector<8x128xf32>
    tpu.vector_store %arg4[%c0_22, %c0_23], %81 {strides = array<i32>} : memref<8x128xf32, #tpu.memory_space<vmem>>, vector<8x128xf32>,
    return
  }
  func.func @transform_0(%arg0: i32) -> (i32, i32) {
    %c0_i32 = arith.constant 0 : i32
    %c0_i32_0 = arith.constant 0 : i32
    return %arg0, %c0_i32 : i32, i32
  }
  func.func @transform_1(%arg0: i32) -> (i32, i32) {
    %c0_i32 = arith.constant 0 : i32
    %c0_i32_0 = arith.constant 0 : i32
    %c0_i32_1 = arith.constant 0 : i32
    return %c0_i32, %c0_i32_0 : i32, i32
  }
  func.func @transform_2(%arg0: i32) -> (i32, i32) {
    %c0_i32 = arith.constant 0 : i32
    %c0_i32_0 = arith.constant 0 : i32
    %c0_i32_1 = arith.constant 0 : i32
    return %c0_i32, %c0_i32_0 : i32, i32
  }
  func.func @transform_3(%arg0: i32) -> (i32, i32) {
    %c0_i32 = arith.constant 0 : i32
    %c0_i32_0 = arith.constant 0 : i32
    return %arg0, %c0_i32 : i32, i32
  }
}

</mosaic_0001>

<llo_original>
// kernel: tpu_custom_call.1
$region0: #{tpu_custom_call.1}
  #allocation0 [shape = 'u32[]', space=smem, size = 0x4, offset = 0x4, fixed_abs, tag = 'smem constant byte address 0x4 - core index']
  #allocation1 [shape = 'u32[144,128]{1,0:T(1,128)}', space=vmem, size = 0x12000, scoped, tag = 'internal scratch']
  %s0 = inlined_call_operand.hbm [shape: f32[8,128], index: 0, kind: input, shape index: {}]
  %s1 = inlined_call_operand.hbm [shape: bf16[160,128], index: 1, kind: input, shape index: {}]
  %s2 = inlined_call_operand.hbm [shape: f32[8,128], index: 2, kind: input, shape index: {}]
  %s3 = inlined_call_operand.hbm [shape: f32[8,128], index: 3, kind: output, shape index: {}]
  %s4 = sld [smem:[#allocation0]]
  $region34: #{tpu_custom_call.1} parent=0
    _
  %s6 = ssub.s32 1, %s4
  %s7 = scalar_select 0, %s6, %s4
  $region1: #{tpu_custom_call.1} parent=0
    #allocation2 [shape = 'u8[4096]{0}', space=vmem, size = 0x1000, scoped, tag = 'input window, operand 0, single buffered']
    #allocation3 [shape = 's32[1]{0}', space=sflag, size = 0x4, scoped, tag = 'scoped memory for tpu_custom_call.1']
    #allocation4 [shape = 's32[1]{0}', space=sflag, size = 0x4, scoped, tag = 'scoped memory for tpu_custom_call.1']
    #allocation5 [shape = 'u8[40960]{0}', space=vmem, size = 0xa000, scoped, tag = 'input window, operand 1, single buffered']
    #allocation6 [shape = 's32[1]{0}', space=sflag, size = 0x4, scoped, tag = 'scoped memory for tpu_custom_call.1']
    #allocation7 [shape = 'u8[4096]{0}', space=vmem, size = 0x1000, scoped, tag = 'input window, operand 2, single buffered']
    #allocation8 [shape = 'u8[4096]{0}', space=vmem, size = 0x1000, scoped, tag = 'output window, operand 0, single buffered']
    %8 = vsyncpa [#allocation3], 0
    %9 = vsyncpa [#allocation6], 0
    %10 = vsyncpa [#allocation4], 0
    // Predicated region
    $region2: #{tpu_custom_call.1} parent=1 // pred_check
      _
    $region3: #{tpu_custom_call.1} parent=1 // pred_check_branch
      %12 = sbr.rel (0) target = $region5
    $region4: #{tpu_custom_call.1} parent=1 // pred_region
      %s14 = ssub.s32 128, 128
      %15 = vsyncadd [#allocation3], %s14
      %s17 = sshll.u32 [#allocation2], 4
      %s18 = int_to_ptr.vmem [resolvable:$true] %s17
      %20 = dma.hbm_to_vmem [thread:$0]  %s0, 128, %s18, [#allocation3]
    $region5: #{tpu_custom_call.1} parent=1 // pred_fallthru
      _
    // Predicated region
    $region6: #{tpu_custom_call.1} parent=1 // pred_check
      _
    $region7: #{tpu_custom_call.1} parent=1 // pred_check_branch
      %22 = sbr.rel (0) target = $region9
    $region8: #{tpu_custom_call.1} parent=1 // pred_region
      %s24 = ssub.s32 1280, 1280
      %25 = vsyncadd [#allocation6], %s24
      %s26 = sshll.u32 [#allocation5], 4
      %s27 = int_to_ptr.vmem [resolvable:$true] %s26
      %32 = dma.hbm_to_vmem [thread:$0]  %s1, 1280, %s27, [#allocation6], 64, 64, 4
    $region9: #{tpu_custom_call.1} parent=1 // pred_fallthru
      _
    // Predicated region
    $region10: #{tpu_custom_call.1} parent=1 // pred_check
      _
    $region11: #{tpu_custom_call.1} parent=1 // pred_check_branch
      %34 = sbr.rel (0) target = $region13
    $region12: #{tpu_custom_call.1} parent=1 // pred_region
      %s36 = ssub.s32 128, 128
      %37 = vsyncadd [#allocation6], %s36
      %s39 = sshll.u32 [#allocation7], 4
      %s40 = int_to_ptr.vmem [resolvable:$true] %s39
      %42 = dma.hbm_to_vmem [thread:$0]  %s2, 128, %s40, [#allocation6]
    $region13: #{tpu_custom_call.1} parent=1 // pred_fallthru
      _
    // Predicated region
    $region14: #{tpu_custom_call.1} parent=1 // pred_check
      _
    $region15: #{tpu_custom_call.1} parent=1 // pred_check_branch
      %44 = sbr.rel (0) target = $region17
    $region16: #{tpu_custom_call.1} parent=1 // pred_region
      %45 = dma.done [#allocation3], 128
    $region17: #{tpu_custom_call.1} parent=1 // pred_fallthru
      _
    // Predicated region
    $region18: #{tpu_custom_call.1} parent=1 // pred_check
      _
    $region19: #{tpu_custom_call.1} parent=1 // pred_check_branch
      %47 = sbr.rel (0) target = $region21
    $region20: #{tpu_custom_call.1} parent=1 // pred_region
      %48 = dma.done [#allocation6], 1280
    $region21: #{tpu_custom_call.1} parent=1 // pred_fallthru
      _
    // Predicated region
    $region22: #{tpu_custom_call.1} parent=1 // pred_check
      _
    $region23: #{tpu_custom_call.1} parent=1 // pred_check_branch
      %50 = sbr.rel (0) target = $region25
    $region24: #{tpu_custom_call.1} parent=1 // pred_region
      %51 = dma.done [#allocation6], 128
    $region25: #{tpu_custom_call.1} parent=1 // pred_fallthru
      _
    %v53 = vld [vmem:[#allocation2] sm:$0xff]
    %v54 = vld [vmem:[#allocation7] sm:$0xff]
    %v55 = vld [vmem:[#allocation5] sm:$0xf]
    %v56 = vld [vmem:[#allocation5 + $0x4] sm:$0xf]
    %v57 = vld [vmem:[#allocation5 + $0x8] sm:$0xf]
    %v58 = vld [vmem:[#allocation5 + $0xc] sm:$0xf]
    %v59 = vld [vmem:[#allocation5 + $0x10] sm:$0xf]
    %v60 = vld [vmem:[#allocation5 + $0x14] sm:$0xf]
    %v61 = vld [vmem:[#allocation5 + $0x18] sm:$0xf]
    %v62 = vld [vmem:[#allocation5 + $0x1c] sm:$0xf]
    %v63 = vld [vmem:[#allocation5 + $0x20] sm:$0xf]
    %v64 = vld [vmem:[#allocation5 + $0x24] sm:$0xf]
    %v65 = vld [vmem:[#allocation5 + $0x28] sm:$0xf]
    %v66 = vld [vmem:[#allocation5 + $0x2c] sm:$0xf]
    %v67 = vld [vmem:[#allocation5 + $0x30] sm:$0xf]
    %v68 = vld [vmem:[#allocation5 + $0x34] sm:$0xf]
    %v69 = vld [vmem:[#allocation5 + $0x38] sm:$0xf]
    %v70 = vld [vmem:[#allocation5 + $0x3c] sm:$0xf]
    %v71 = vld [vmem:[#allocation5 + $0x40] sm:$0xf]
    %v72 = vld [vmem:[#allocation5 + $0x44] sm:$0xf]
    %v73 = vld [vmem:[#allocation5 + $0x48] sm:$0xf]
    %v74 = vld [vmem:[#allocation5 + $0x4c] sm:$0xf]
    %v75 = vpack.c.bf16 %v53, %v53
    %v76 = vlaneseq
    %v77 = vshrl.u32 %v76, 7
    %v78 = vsub.s32 0, %v77
    %v79 = vrot.slane %v54, %v78
    %v84 = vunpack.c.l.b16 %v55
    %v85 = vunpack.c.l.b16 %v56
    %v86 = vunpack.c.l.b16 %v57
    %v87 = vunpack.c.l.b16 %v58
    %v88 = vpack.c.b16 %v85, %v84
    %v89 = vpack.c.b16 %v87, %v86
    %vm92 = vcmask 261120
    %v94 = vsel %vm92, %v75, 0
    %96 = vmatprep.subr.bf16.mxu0 0
    %97 = vmatpush1.bf16.msra.mxu0 %v88
    %98 = vmatprep.subr.bf16.mxu0 0
    %99 = vmatpush1.bf16.msra.mxu0 %v89
    %100 = vmatprep.subr.bf16.mxu0 0
    %101 = vmatpush1.bf16.msra.mxu0 0
    %102 = vmatprep.subr.bf16.mxu0 0
    %103 = vmatpush1.bf16.msra.mxu0 0
    %104 = vmatprep.subr.bf16.mxu0 0
    %105 = vmatpush1.bf16.msra.mxu0 0
    %106 = vmatprep.subr.bf16.mxu0 0
    %107 = vmatpush1.bf16.msra.mxu0 0
    %108 = vmatprep.subr.bf16.mxu0 0
    %109 = vmatpush1.bf16.msra.mxu0 0
    %110 = vmatprep.subr.bf16.mxu0 0
    %111 = vmatpush1.bf16.msra.mxu0 0
    %112 = vmatprep.subr.bf16.mxu0 0
    %113 = vmatpush1.bf16.msra.mxu0 0
    %114 = vmatprep.subr.bf16.mxu0 0
    %115 = vmatpush1.bf16.msra.mxu0 0
    %116 = vmatprep.subr.bf16.mxu0 0
    %117 = vmatpush1.bf16.msra.mxu0 0
    %118 = vmatprep.subr.bf16.mxu0 0
    %119 = vmatpush1.bf16.msra.mxu0 0
    %120 = vmatprep.subr.bf16.mxu0 0
    %121 = vmatpush1.bf16.msra.mxu0 0
    %122 = vmatprep.subr.bf16.mxu0 0
    %123 = vmatpush1.bf16.msra.mxu0 0
    %124 = vmatprep.subr.bf16.mxu0 0
    %125 = vmatpush1.bf16.msra.mxu0 0
    %126 = vmatprep.subr.bf16.mxu0 0
    %127 = vmatpush1.bf16.msra.mxu0 0
    %128 = vmatprep.mubr.bf16.mxu0 0
    %129 = vmatmul.mubr.bf16.gmra.mrb[0].mxu0 %v94
    %v130 = vpop.f32.mrb[0].mxu0
    %v131 = vadd.f32 %v79, %v130
    %v132 = vpop.f32.mrb[0].mxu0
    %v133 = vpop.f32.mrb[0].mxu0
    %v134 = vpop.f32.mrb[0].mxu0
    %135 = vdwg.mxu0
    %v136 = vmax.f32 %v131, 0.0
    %v137 = vpack.c.bf16 %v136, %v136
    %v138 = vlaneseq
    %v139 = vshrl.u32 %v138, 7
    %v140 = vsub.s32 1, %v139
    %v141 = vrot.slane %v54, %v140
    %v150 = vunpack.c.l.b16 %v59
    %v151 = vunpack.c.l.b16 %v60
    %v152 = vunpack.c.l.b16 %v61
    %v153 = vunpack.c.l.b16 %v62
    %v154 = vunpack.c.l.b16 %v63
    %v155 = vunpack.c.l.b16 %v64
    %v156 = vunpack.c.l.b16 %v65
    %v157 = vunpack.c.l.b16 %v66
    %v158 = vpack.c.b16 %v151, %v150
    %v159 = vpack.c.b16 %v153, %v152
    %v160 = vpack.c.b16 %v155, %v154
    %v161 = vpack.c.b16 %v157, %v156
    %vm166 = vcmask 523264
    %v168 = vsel %vm166, %v137, 0
    %170 = vmatprep.subr.bf16.mxu0 0
    %171 = vmatpush1.bf16.msra.mxu0 %v158
    %172 = vmatprep.subr.bf16.mxu0 0
    %173 = vmatpush1.bf16.msra.mxu0 %v159
    %174 = vmatprep.subr.bf16.mxu0 0
    %175 = vmatpush1.bf16.msra.mxu0 %v160
    %176 = vmatprep.subr.bf16.mxu0 0
    %177 = vmatpush1.bf16.msra.mxu0 %v161
    %178 = vmatprep.subr.bf16.mxu0 0
    %179 = vmatpush1.bf16.msra.mxu0 0
    %180 = vmatprep.subr.bf16.mxu0 0
    %181 = vmatpush1.bf16.msra.mxu0 0
    %182 = vmatprep.subr.bf16.mxu0 0
    %183 = vmatpush1.bf16.msra.mxu0 0
    %184 = vmatprep.subr.bf16.mxu0 0
    %185 = vmatpush1.bf16.msra.mxu0 0
    %186 = vmatprep.subr.bf16.mxu0 0
    %187 = vmatpush1.bf16.msra.mxu0 0
    %188 = vmatprep.subr.bf16.mxu0 0
    %189 = vmatpush1.bf16.msra.mxu0 0
    %190 = vmatprep.subr.bf16.mxu0 0
    %191 = vmatpush1.bf16.msra.mxu0 0
    %192 = vmatprep.subr.bf16.mxu0 0
    %193 = vmatpush1.bf16.msra.mxu0 0
    %194 = vmatprep.subr.bf16.mxu0 0
    %195 = vmatpush1.bf16.msra.mxu0 0
    %196 = vmatprep.subr.bf16.mxu0 0
    %197 = vmatpush1.bf16.msra.mxu0 0
    %198 = vmatprep.subr.bf16.mxu0 0
    %199 = vmatpush1.bf16.msra.mxu0 0
    %200 = vmatprep.subr.bf16.mxu0 0
    %201 = vmatpush1.bf16.msra.mxu0 0
    %202 = vmatprep.mubr.bf16.mxu0 0
    %203 = vmatmul.mubr.bf16.gmra.mrb[0].mxu0 %v168
    %v204 = vpop.f32.mrb[0].mxu0
    %v205 = vadd.f32 %v141, %v204
    %v206 = vpop.f32.mrb[0].mxu0
    %v207 = vpop.f32.mrb[0].mxu0
    %v208 = vpop.f32.mrb[0].mxu0
    %209 = vdwg.mxu0
    %v210 = vmax.f32 %v205, 0.0
    %v211 = vpack.c.bf16 %v210, %v210
    %v212 = vlaneseq
    %v213 = vshrl.u32 %v212, 7
    %v214 = vsub.s32 2, %v213
    %v215 = vrot.slane %v54, %v214
    %v224 = vunpack.c.l.b16 %v67
    %v225 = vunpack.c.l.b16 %v68
    %v226 = vunpack.c.l.b16 %v69
    %v227 = vunpack.c.l.b16 %v70
    %v228 = vunpack.c.l.b16 %v71
    %v229 = vunpack.c.l.b16 %v72
    %v230 = vunpack.c.l.b16 %v73
    %v231 = vunpack.c.l.b16 %v74
    %v232 = vpack.c.b16 %v225, %v224
    %v233 = vpack.c.b16 %v227, %v226
    %v234 = vpack.c.b16 %v229, %v228
    %v235 = vpack.c.b16 %v231, %v230
    %v241 = vsel %vm166, %v211, 0
    %243 = vmatprep.subr.bf16.mxu0 0
    %244 = vmatpush1.bf16.msra.mxu0 %v232
    %245 = vmatprep.subr.bf16.mxu0 0
    %246 = vmatpush1.bf16.msra.mxu0 %v233
    %247 = vmatprep.subr.bf16.mxu0 0
    %248 = vmatpush1.bf16.msra.mxu0 %v234
    %249 = vmatprep.subr.bf16.mxu0 0
    %250 = vmatpush1.bf16.msra.mxu0 %v235
    %251 = vmatprep.subr.bf16.mxu0 0
    %252 = vmatpush1.bf16.msra.mxu0 0
    %253 = vmatprep.subr.bf16.mxu0 0
    %254 = vmatpush1.bf16.msra.mxu0 0
    %255 = vmatprep.subr.bf16.mxu0 0
    %256 = vmatpush1.bf16.msra.mxu0 0
    %257 = vmatprep.subr.bf16.mxu0 0
    %258 = vmatpush1.bf16.msra.mxu0 0
    %259 = vmatprep.subr.bf16.mxu0 0
    %260 = vmatpush1.bf16.msra.mxu0 0
    %261 = vmatprep.subr.bf16.mxu0 0
    %262 = vmatpush1.bf16.msra.mxu0 0
    %263 = vmatprep.subr.bf16.mxu0 0
    %264 = vmatpush1.bf16.msra.mxu0 0
    %265 = vmatprep.subr.bf16.mxu0 0
    %266 = vmatpush1.bf16.msra.mxu0 0
    %267 = vmatprep.subr.bf16.mxu0 0
    %268 = vmatpush1.bf16.msra.mxu0 0
    %269 = vmatprep.subr.bf16.mxu0 0
    %270 = vmatpush1.bf16.msra.mxu0 0
    %271 = vmatprep.subr.bf16.mxu0 0
    %272 = vmatpush1.bf16.msra.mxu0 0
    %273 = vmatprep.subr.bf16.mxu0 0
    %274 = vmatpush1.bf16.msra.mxu0 0
    %275 = vmatprep.mubr.bf16.mxu0 0
    %276 = vmatmul.mubr.bf16.gmra.mrb[0].mxu0 %v241
    %v277 = vpop.f32.mrb[0].mxu0
    %v278 = vadd.f32 %v215, %v277
    %v279 = vpop.f32.mrb[0].mxu0
    %v280 = vpop.f32.mrb[0].mxu0
    %v281 = vpop.f32.mrb[0].mxu0
    %282 = vdwg.mxu0
    %v283 = vlaneseq
    %v284 = vand.u32 %v283, 127
    %vm285 = vcmp.lt.s32.totalorder %v284, 4
    %vm286 = vcmp.ge.s32.totalorder %v284, 24
    %vm287 = vcmp.lt.s32.totalorder %v284, 28
    %vm288 = vmand %vm286, %vm287
    %v289 = vmul.f32 %v54, 1.442695
    %v290 = vpow.pop %v289
    %v291 = vsub.f32 0.0, %v54
    %v292 = vmul.f32 %v291, 1.442695
    %v293 = vpow.pop %v292
    %v294 = vsub.f32 %v53, %v278
    %v295 = vlaneseq
    %v296 = vshrl.u32 %v295, 7
    %v297 = vsub.s32 3, %v296
    %v298 = vrot.slane %v293, %v297
    %v299 = vmul.f32 %v294, %v298
    %v300 = vsel %vm288, %v299, 0.0
    %v301 = vsel %vm285, %v53, %v300
    %v302 = vmul.f32 %v301, %v301
    %v303 = vlaneseq
    %v304 = vshrl.u32 %v303, 7
    %v305 = vsub.s32 4, %v304
    %v306 = vrot.slane %v54, %v305
    %v307 = vadd.f32 %v302, %v306
    %v308 = vmul.f32 %v307, -0.5
    %v309 = vsel %vm285, %v308, 0.0
    %310 = vadd.xlane.f32.xlu0 %v309
    %v311 = vpop.xlane.xlu0 %310
    %v312 = vsel %vm288, %v308, 0.0
    %313 = vadd.xlane.f32.xlu0 %v312
    %v314 = vpop.xlane.xlu0 %313
    %vm315 = vcmp.eq.s32.totalorder %v284, 6
    %vm316 = vmor %vm285, %vm315
    %v317 = vsel %vm316, %v278, 0.0
    %v318 = vlaneseq
    %v319 = vshrl.u32 %v318, 7
    %v320 = vsub.s32 3, %v319
    %v321 = vrot.slane %v290, %v320
    %v322 = vmul.f32 %v321, %v301
    %v323 = vsel %vm285, %v322, 0.0
    %v324 = vadd.f32 %v317, %v323
    %vm325 = vcmp.eq.s32.totalorder %v284, 4
    %vm326 = vcmp.eq.s32.totalorder %v284, 5
    %v327 = vsel %vm326, %v311, 0.0
    %v328 = vsel %vm325, %v314, %v327
    %v329 = vadd.f32 %v324, %v328
    %330 = vst [vmem:[#allocation8] sm:$0xff] %v329
    // Predicated region
    $region26: #{tpu_custom_call.1} parent=1 // pred_check
      _
    $region27: #{tpu_custom_call.1} parent=1 // pred_check_branch
      %332 = sbr.rel (0) target = $region29
    $region28: #{tpu_custom_call.1} parent=1 // pred_region
      %s334 = ssub.s32 128, 128
      %335 = vsyncadd [#allocation4], %s334
      %s337 = sshll.u32 [#allocation8], 4
      %s338 = int_to_ptr.vmem [resolvable:$true] %s337
      %340 = dma.vmem_to_hbm [thread:$0]  %s338, 128, %s3, [#allocation4]
    $region29: #{tpu_custom_call.1} parent=1 // pred_fallthru
      _
    // Predicated region
    $region30: #{tpu_custom_call.1} parent=1 // pred_check
      _
    $region31: #{tpu_custom_call.1} parent=1 // pred_check_branch
      %342 = sbr.rel (0) target = $region33
    $region32: #{tpu_custom_call.1} parent=1 // pred_region
      %343 = dma.done [#allocation4], 128
    $region33: #{tpu_custom_call.1} parent=1 // pred_fallthru
      _
    %344 = vsyncpa [#allocation3], 1
    %345 = vsyncpa [#allocation6], 1
    %346 = vsyncpa [#allocation4], 1

</llo_original>
